<compile_context>
chip_gen: v7x
topology: tpu7x:2x2x1
jax: 0.10.0
libtpu: 0.0.40
codegen_flags: <defaults>
</compile_context>

<pallas_src>
import functools

import jax
import jax.numpy as jnp
from jax.experimental import pallas as pl
from jax.experimental.pallas import tpu as pltpu


def _tensorcores_per_chip():
    """Best-effort TensorCore count per chip (2 on v7x, 1 on v5e/v6e)."""
    try:
        info = pltpu.get_tpu_info()
        for name in ("num_cores", "core_count", "num_tensorcores",
                     "tensor_core_count", "tensorcores_per_chip"):
            v = getattr(info, name, None)
            if v is not None:
                v = int(v)
                if 1 <= v <= 16:
                    return v
    except Exception:
        pass
    return 1


def _entropy_partial_kernel(x_ref, out_ref, acc_ref, *, epsilon, valid_rows,
                            block_rows, blocks_per_core, num_blocks,
                            has_ragged, has_dup):
    p = pl.program_id(0)          # core / partial index (parallel axis)
    j = pl.program_id(1)          # block index within this core (reduction axis)

    @pl.when(j == 0)
    def _():
        acc_ref[...] = jnp.zeros_like(acc_ref)

    linear_block = p * blocks_per_core + j

    def _accumulate(x):
        x = x.astype(jnp.float32)
        # Sign folded into the final store: accumulate +x*log(x+eps).
        # Per-block sublane reduce -> one vreg; pure filler under the DMA, and
        # it keeps the persistent accumulator to a single vreg (no per-vreg
        # VMEM load+store, no big zero-init).
        acc_ref[...] += jnp.sum(x * jnp.log(x + epsilon), axis=0,
                                keepdims=True)

    if not (has_ragged or has_dup):
        # Evenly tiled grid: every block is clean, no masking anywhere.
        _accumulate(x_ref[...])
    else:
        @pl.when(linear_block < num_blocks - 1)
        def _():                                   # clean blocks: mask-free
            _accumulate(x_ref[...])

        @pl.when(linear_block == num_blocks - 1)
        def _():                                   # the (possibly ragged) last block
            x = x_ref[...].astype(jnp.float32)
            if has_ragged:
                # Mask padded rows to 0 BEFORE the log so they contribute
                # exactly 0 (-0 * log(0 + eps) == 0).
                row_ids = linear_block * block_rows + jax.lax.broadcasted_iota(
                    jnp.int32, x.shape, 0)
                x = jnp.where(row_ids < valid_rows, x, jnp.float32(0.0))
            _accumulate(x)
        # Blocks with linear_block >= num_blocks are clamped duplicates of the
        # last block (only possible on multi-core splits): skipped entirely.

    @pl.when(j == pl.num_programs(1) - 1)
    def _():
        # Single negate + lane-dense (1, 1, 128) partial per core.
        out_ref[...] = -acc_ref[...][None, ...]


def entropy_loss(x, coeff=1.0, reduction="mean", *, row_tile=8192,
                 num_cores=None):
    """Pallas implementation of EntropyLoss.forward."""
    epsilon = 1e-05

    if reduction == "none":
        # TODO(synk): per-sample ('none') reduction stays in plain JAX; the
        # Pallas kernel below covers the default 'mean' reduction.
        ent = -x * jnp.log(x + epsilon)
        return jnp.sum(ent, axis=1)

    n = x.size
    denom = n // x.shape[1]        # entropy.mean() averages all axes but dim=1

    lanes = 128
    flat = x.reshape(-1)
    rows = n // lanes
    rem = n - rows * lanes

    tail_sum = jnp.float32(0.0)
    if rem:
        # Sub-128-lane tail (< 128 elements): one fused XLA reduce.
        tail = flat[rows * lanes:].astype(jnp.float32)
        tail_sum = jnp.sum(-tail * jnp.log(tail + epsilon))

    if rows == 0:
        total = tail_sum
    else:
        # TODO(synk): when n is not a 128-multiple this slice materializes an
        # HBM copy of the main slab before the kernel; producers that can
        # guarantee 128-multiple numel avoid it entirely (the n%128==0 path
        # below is copy-free).
        main = (flat[: rows * lanes] if rem else flat).reshape(rows, lanes)

        row_tile = max(8, (int(row_tile) // 8) * 8)       # keep blocks 8-row aligned
        bt = rows if rows < row_tile else row_tile
        num_blocks = pl.cdiv(rows, bt)

        ncores = num_cores if num_cores is not None else _tensorcores_per_chip()
        ncores = max(1, min(int(ncores), num_blocks))
        bpc = pl.cdiv(num_blocks, ncores)                 # blocks per core

        has_ragged = (num_blocks * bt) != rows
        has_dup = (ncores * bpc) != num_blocks

        def x_index_map(p, j):
            blk = p * bpc + j
            # Clamp duplicate / out-of-range blocks; the kernel skips them.
            return (jnp.minimum(blk, num_blocks - 1), 0)

        kernel = functools.partial(
            _entropy_partial_kernel,
            epsilon=epsilon,
            valid_rows=rows,
            block_rows=bt,
            blocks_per_core=bpc,
            num_blocks=num_blocks,
            has_ragged=has_ragged,
            has_dup=has_dup,
        )

        block_bytes = bt * lanes * main.dtype.itemsize
        vmem_limit = int(min(64 << 20,
                             max(16 << 20, 2 * block_bytes + (4 << 20))))

        cost = pl.CostEstimate(
            flops=3 * rows * lanes,
            transcendentals=rows * lanes,
            bytes_accessed=rows * lanes * main.dtype.itemsize
            + ncores * lanes * 4,
        )

        partials = pl.pallas_call(
            kernel,
            out_shape=jax.ShapeDtypeStruct((ncores, 1, lanes), jnp.float32),
            grid_spec=pltpu.PrefetchScalarGridSpec(
                num_scalar_prefetch=0,
                grid=(ncores, bpc),
                in_specs=[pl.BlockSpec((bt, lanes), x_index_map)],
                out_specs=pl.BlockSpec((1, 1, lanes), lambda p, j: (p, 0, 0)),
                scratch_shapes=[pltpu.VMEM((1, lanes), jnp.float32)],
            ),
            compiler_params=pltpu.CompilerParams(
                dimension_semantics=("parallel", "arbitrary"),
                vmem_limit_bytes=vmem_limit,
            ),
            cost_estimate=cost,
        )(main)

        total = jnp.sum(partials, dtype=jnp.float32) + tail_sum

    result = jnp.float32(coeff) * (total / jnp.float32(denom))
    return result.astype(x.dtype)


def entropy_loss_reference(x, coeff=1.0, reduction="mean"):
    """Pure-JAX reference matching the PyTorch module."""
    epsilon = 1e-05
    ent = -x * jnp.log(x + epsilon)
    ent = jnp.sum(ent, axis=1)
    if reduction == "none":
        return ent
    return jnp.float32(coeff) * jnp.mean(ent)


if __name__ == "__main__":
    key = jax.random.PRNGKey(0)
    k1, k2, k3, k4, k5, k6 = jax.random.split(key, 6)

    tests = []

    # (batch=8, classes=32): typical CDAN entropy input (softmax probabilities).
    p1 = jax.nn.softmax(jax.random.normal(k1, (8, 32), jnp.float32), axis=1)
    tests.append((p1, 1.0, {}))

    # (batch=2, channels=4, 16x16): sum over dim=1, mean over the rest.
    p2 = jax.nn.softmax(jax.random.normal(k2, (2, 4, 16, 16), jnp.float32),
                        axis=1)
    tests.append((p2, 0.5, {}))

    # Multi-block grid + ragged last block + clamped duplicate block (small
    # row_tile + forced 2-core split to exercise every masking path).
    p3 = jax.nn.softmax(jax.random.normal(k3, (20, 128), jnp.float32), axis=1)
    tests.append((p3, 2.0, {"row_tile": 8, "num_cores": 2}))

    # Total element count not a multiple of 128: lane tail handled in wrapper.
    p4 = jax.nn.softmax(jax.random.normal(k4, (6, 50), jnp.float32), axis=1)
    tests.append((p4, 1.0, {}))

    # Evenly divided forced 2-core split, no masking anywhere.
    p5 = jax.nn.softmax(jax.random.normal(k5, (128, 128), jnp.float32), axis=1)
    tests.append((p5, 1.5, {"row_tile": 8, "num_cores": 2}))

    # Single block whose row count is not a multiple of 8 (block == full dim).
    p6 = jax.nn.softmax(jax.random.normal(k6, (12, 128), jnp.float32), axis=1)
    tests.append((p6, 1.0, {}))

    for xin, coeff, kwargs in tests:
        out = jax.block_until_ready(
            entropy_loss(xin, coeff=coeff, reduction="mean", **kwargs))
        ref = entropy_loss_reference(xin, coeff=coeff, reduction="mean")
        assert jnp.allclose(out, ref, rtol=1e-4, atol=1e-5), \
            (xin.shape, out, ref)

    print("KERNEL_OK")
</pallas_src>

<mosaic_0001>
module attributes {stable_mosaic.version = 11 : i64} {
  func.func @_entropy_partial_kernel(%arg0: i32, %arg1: i32, %arg2: memref<2x128xf32, #tpu.memory_space<vmem>>, %arg3: memref<1x1x128xf32, #tpu.memory_space<vmem>>, %arg4: memref<1x128xf32, #tpu.memory_space<vmem>>) attributes {dimension_semantics = [#tpu.dimension_semantics<parallel>, #tpu.dimension_semantics<arbitrary>], iteration_bounds = array<i64: 1, 1>, scalar_prefetch = 0 : i64, scratch_operands = 1 : i64, tpu.core_type = #tpu.core_type<tc>, window_params = [{transform_indices = @transform_0, window_bounds = array<i64: 2, 128>}, {transform_indices = @transform_1, window_bounds = array<i64: 1, 1, 128>}]} {
    %c0_i32 = arith.constant 0 : i32
    %0 = arith.cmpi eq, %arg1, %c0_i32 : i32
    %1 = arith.extui %0 : i1 to i32
    %c0_i32_0 = arith.constant 0 : i32
    %2 = arith.cmpi ne, %1, %c0_i32_0 : i32
    scf.if %2 {
      %cst_9 = arith.constant 0.000000e+00 : f32
      %16 = vector.broadcast %cst_9 : f32 to vector<1x128xf32>
      %c0_10 = arith.constant 0 : index
      %c0_11 = arith.constant 0 : index
      %17 = vector.load %arg4[%c0_10, %c0_11] : memref<1x128xf32, #tpu.memory_space<vmem>>, vector<1x128xf32>
      tpu.vector_store %arg4[%c0_10, %c0_11], %16 {strides = array<i32>} : memref<1x128xf32, #tpu.memory_space<vmem>>, vector<1x128xf32>,
    } else {
    }
    %c0 = arith.constant 0 : index
    %c0_1 = arith.constant 0 : index
    %3 = vector.load %arg2[%c0, %c0_1] : memref<2x128xf32, #tpu.memory_space<vmem>>, vector<2x128xf32>
    %c0_2 = arith.constant 0 : index
    %c0_3 = arith.constant 0 : index
    %4 = vector.load %arg4[%c0_2, %c0_3] : memref<1x128xf32, #tpu.memory_space<vmem>>, vector<1x128xf32>
    %cst = arith.constant 9.99999974E-6 : f32
    %5 = vector.broadcast %cst : f32 to vector<2x128xf32>
    %6 = arith.addf %3, %5 : vector<2x128xf32>
    %7 = math.log %6 : vector<2x128xf32>
    %8 = arith.mulf %3, %7 : vector<2x128xf32>
    %cst_4 = arith.constant dense<0.000000e+00> : vector<128xf32>
    %9 = vector.multi_reduction <add>, %8, %cst_4 [0] : vector<2x128xf32> to vector<128xf32>
    %10 = vector.shape_cast %9 : vector<128xf32> to vector<1x128xf32>
    %11 = arith.addf %4, %10 : vector<1x128xf32>
    %c0_5 = arith.constant 0 : index
    %c0_6 = arith.constant 0 : index
    %12 = vector.load %arg4[%c0_5, %c0_6] : memref<1x128xf32, #tpu.memory_space<vmem>>, vector<1x128xf32>
    tpu.vector_store %arg4[%c0_5, %c0_6], %11 {strides = array<i32>} : memref<1x128xf32, #tpu.memory_space<vmem>>, vector<1x128xf32>,
    %c0_i32_7 = arith.constant 0 : i32
    %13 = arith.cmpi eq, %arg1, %c0_i32_7 : i32
    %14 = arith.extui %13 : i1 to i32
    %c0_i32_8 = arith.constant 0 : i32
    %15 = arith.cmpi ne, %14, %c0_i32_8 : i32
    scf.if %15 {
      %c0_9 = arith.constant 0 : index
      %c0_10 = arith.constant 0 : index
      %16 = vector.load %arg4[%c0_9, %c0_10] : memref<1x128xf32, #tpu.memory_space<vmem>>, vector<1x128xf32>
      %17 = vector.shape_cast %16 : vector<1x128xf32> to vector<1x1x128xf32>
      %cst_11 = arith.constant 0.000000e+00 : f32
      %18 = vector.broadcast %cst_11 : f32 to vector<1x1x128xf32>
      %19 = arith.subf %18, %17 : vector<1x1x128xf32>
      %c0_12 = arith.constant 0 : index
      %c0_13 = arith.constant 0 : index
      %c0_14 = arith.constant 0 : index
      %20 = vector.load %arg3[%c0_12, %c0_13, %c0_14] : memref<1x1x128xf32, #tpu.memory_space<vmem>>, vector<1x1x128xf32>
      tpu.vector_store %arg3[%c0_12, %c0_13, %c0_14], %19 {strides = array<i32>} : memref<1x1x128xf32, #tpu.memory_space<vmem>>, vector<1x1x128xf32>,
    } else {
    }
    return
  }
  func.func @transform_0(%arg0: i32, %arg1: i32) -> (i32, i32) {
    %c1_i32 = arith.constant 1 : i32
    %0 = arith.muli %arg0, %c1_i32 : i32
    %1 = arith.addi %0, %arg1 : i32
    %c0_i32 = arith.constant 0 : i32
    %2 = arith.minsi %1, %c0_i32 : i32
    %c0_i32_0 = arith.constant 0 : i32
    %c0_i32_1 = arith.constant 0 : i32
    return %2, %c0_i32_0 : i32, i32
  }
  func.func @transform_1(%arg0: i32, %arg1: i32) -> (i32, i32, i32) {
    %c0_i32 = arith.constant 0 : i32
    %c0_i32_0 = arith.constant 0 : i32
    %c0_i32_1 = arith.constant 0 : i32
    return %arg0, %c0_i32, %c0_i32_0 : i32, i32, i32
  }
}

</mosaic_0001>

<llo_original>
// kernel: tpu_custom_call.1
$region0: #{tpu_custom_call.1}
  #allocation0 [shape = 'u32[]', space=smem, size = 0x4, offset = 0x4, fixed_abs, tag = 'smem constant byte address 0x4 - core index']
  #allocation1 [shape = 'u32[144,128]{1,0:T(1,128)}', space=vmem, size = 0x12000, scoped, tag = 'internal scratch']
  #allocation2 [shape = 'f32[1,128]{1,0:T(1,128)}', space=vmem, size = 0x200, scoped, tag = 'scratch operand']
  %s0 = inlined_call_operand.hbm [shape: f32[2,128], index: 0, kind: input, shape index: {}]
  %s1 = inlined_call_operand.hbm [shape: f32[1,1,128], index: 1, kind: output, shape index: {}]
  %s2 = sld [smem:[#allocation0]]
  $region26: #{tpu_custom_call.1} parent=0
    _
  %s4 = ssub.s32 1, %s2
  %s5 = scalar_select 0, %s4, %s2
  $region1: #{tpu_custom_call.1} parent=0
    #allocation3 [shape = 'u8[1024]{0}', space=vmem, size = 0x400, scoped, tag = 'input window, operand 0, single buffered']
    #allocation4 [shape = 's32[1]{0}', space=sflag, size = 0x4, scoped, tag = 'scoped memory for tpu_custom_call.1']
    #allocation5 [shape = 's32[1]{0}', space=sflag, size = 0x4, scoped, tag = 'scoped memory for tpu_custom_call.1']
    #allocation6 [shape = 'u8[512]{0}', space=vmem, size = 0x400, scoped, tag = 'output window, operand 0, single buffered']
    %6 = vsyncpa [#allocation4], 0
    %7 = vsyncpa [#allocation5], 0
    // Predicated region
    $region2: #{tpu_custom_call.1} parent=1 // pred_check
      _
    $region3: #{tpu_custom_call.1} parent=1 // pred_check_branch
      %9 = sbr.rel (0) target = $region5
    $region4: #{tpu_custom_call.1} parent=1 // pred_region
      %s10 = sadd.s32 0, 0
      %p11 = scmp.lt.s32.totalorder %s10, 0
      %s12 = scalar_select %p11, %s10, 0
      %s14 = ssub.s32 32, 32
      %15 = vsyncadd [#allocation4], %s14
      %s16 = smul.addr %s12, 32
      %s17 = scalar_lea.hbm %s0, %s16
      %s19 = sshll.u32 [#allocation3], 4
      %s20 = int_to_ptr.vmem [resolvable:$true] %s19
      %22 = dma.hbm_to_vmem [thread:$0]  %s17, 32, %s20, [#allocation4]
    $region5: #{tpu_custom_call.1} parent=1 // pred_fallthru
      _
    // Predicated region
    $region6: #{tpu_custom_call.1} parent=1 // pred_check
      _
    $region7: #{tpu_custom_call.1} parent=1 // pred_check_branch
      %24 = sbr.rel (0) target = $region9
    $region8: #{tpu_custom_call.1} parent=1 // pred_region
      %25 = dma.done [#allocation4], 32
    $region9: #{tpu_custom_call.1} parent=1 // pred_fallthru
      _
    %s26 = sadd.s32 0, 0
    %p27 = scmp.lt.s32.totalorder %s26, 0
    %s28 = scalar_select %p27, %s26, 0
    %p29 = scmp.eq.s32.totalorder 0, 0
    // Predicated region
    $region10: #{tpu_custom_call.1} parent=1 // pred_check
      %p30 = pneg %p29
    $region11: #{tpu_custom_call.1} parent=1 // pred_check_branch
      %32 = sbr.rel (%p30) target = $region13
    $region12: #{tpu_custom_call.1} parent=1 // pred_region
      %33 = vst [vmem:[#allocation2] sm:$0x1] 0.0
    $region13: #{tpu_custom_call.1} parent=1 // pred_fallthru
      _
    %v34 = vld [vmem:[#allocation3] sm:$0x3]
    %v35 = vld [vmem:[#allocation2] sm:$0x1]
    %v36 = vadd.f32 %v34, 1e-05
    %v37 = vlog2.pop %v36
    %v38 = vmul.f32 %v37, 0.6931472
    %v39 = vmul.f32 %v34, %v38
    %vm40 = vcmask 1041408
    %v41 = vsel %vm40, %v39, 0.0
    %v42 = vrot.slane %v41, 4
    %v43 = vadd.f32 %v41, %v42
    %v44 = vrot.slane %v43, 2
    %v45 = vadd.f32 %v43, %v44
    %v46 = vrot.slane %v45, 1
    %v47 = vadd.f32 %v45, %v46
    %v48 = vadd.f32 %v35, %v47
    %49 = vst [vmem:[#allocation2] sm:$0x1] %v48
    // Predicated region
    $region14: #{tpu_custom_call.1} parent=1 // pred_check
      %p50 = pneg %p29
    $region15: #{tpu_custom_call.1} parent=1 // pred_check_branch
      %52 = sbr.rel (%p50) target = $region17
    $region16: #{tpu_custom_call.1} parent=1 // pred_region
      %v53 = vld [vmem:[#allocation2] sm:$0x1]
      %v54 = vsub.f32 0.0, %v53
      %55 = vst [vmem:[#allocation6] sm:$0x1] %v54
    $region17: #{tpu_custom_call.1} parent=1 // pred_fallthru
      _
    // Predicated region
    $region18: #{tpu_custom_call.1} parent=1 // pred_check
      _
    $region19: #{tpu_custom_call.1} parent=1 // pred_check_branch
      %57 = sbr.rel (0) target = $region21
    $region20: #{tpu_custom_call.1} parent=1 // pred_region
      %s59 = ssub.s32 16, 16
      %60 = vsyncadd [#allocation5], %s59
      %s62 = sshll.u32 [#allocation6], 4
      %s63 = int_to_ptr.vmem [resolvable:$true] %s62
      %65 = dma.vmem_to_hbm [thread:$0]  %s63, 16, %s1, [#allocation5]
    $region21: #{tpu_custom_call.1} parent=1 // pred_fallthru
      _
    // Predicated region
    $region22: #{tpu_custom_call.1} parent=1 // pred_check
      _
    $region23: #{tpu_custom_call.1} parent=1 // pred_check_branch
      %67 = sbr.rel (0) target = $region25
    $region24: #{tpu_custom_call.1} parent=1 // pred_region
      %68 = dma.done [#allocation5], 16
    $region25: #{tpu_custom_call.1} parent=1 // pred_fallthru
      _
    %69 = vsyncpa [#allocation4], 1
    %70 = vsyncpa [#allocation5], 1

</llo_original>
